<compile_context>
chip_gen: v5e
topology: v5e:2x2
jax: 0.10.0
libtpu: 0.0.40
codegen_flags: <defaults>
</compile_context>

<pallas_src>
import functools
import math

import jax
import jax.numpy as jnp
from jax import lax
from jax.experimental import pallas as pl
from jax.experimental.pallas import tpu as pltpu


def _round_up(n, m):
    return (n + m - 1) // m * m


def _cdiv(a, b):
    return (a + b - 1) // b


def _vmem_limit_bytes():
    try:
        cap = int(pltpu.get_tpu_info().vmem_capacity_bytes)
    except Exception:
        cap = 64 * 1024 * 1024  # conservative (v7x per-TC) fallback
    return max(32 * 1024 * 1024, (cap * 7) // 8)


def _ln_affine(y, params, *, eps, do_ln, c_valid):
    """y: (tm, C2p) f32; params: (3, C2p) f32 packed [bias; gamma; beta].

    Padded columns (>= c_valid) of W, bias, gamma, beta are exactly zero, so
    sum(y) and sum(y*y) over the padded width already equal the valid-column
    sums -> one-pass, maskless LayerNorm statistics."""
    y = y + params[0:1, :]
    if do_ln:
        inv_c = 1.0 / float(c_valid)
        s1 = jnp.sum(y, axis=-1, keepdims=True)
        s2 = jnp.sum(y * y, axis=-1, keepdims=True)
        mean = s1 * inv_c
        var = jnp.maximum(s2 * inv_c - mean * mean, 0.0)  # guard f32 cancellation
        y = (y - mean) * lax.rsqrt(var + eps)
        y = y * params[1:2, :] + params[2:3, :]
    # TODO(synk): training-mode dropout (pltpu.prng_seed / prng_random_bits
    # Bernoulli masking) not implemented; eval-mode dropout is the identity.
    return y


def _resident_kernel(x_ref, w_ref, p_ref, o_ref, *, eps, do_ln, c_valid):
    # x_ref: (tm, C1p), w_ref: (C1p, C2p) grid-invariant, p_ref: (3, C2p) f32.
    y = jnp.dot(x_ref[...], w_ref[...], preferred_element_type=jnp.float32)
    y = _ln_affine(y, p_ref[...].astype(jnp.float32),
                   eps=eps, do_ln=do_ln, c_valid=c_valid)
    o_ref[...] = y.astype(o_ref.dtype)


def _ksplit_kernel(x_ref, w_ref, p_ref, o_ref, acc_ref, *, eps, do_ln, c_valid):
    # K-split path for weights too large to keep resident in VMEM.
    k = pl.program_id(1)

    @pl.when(k == 0)
    def _():
        acc_ref[...] = jnp.zeros_like(acc_ref)

    acc_ref[...] += jnp.dot(x_ref[...], w_ref[...],
                            preferred_element_type=jnp.float32)

    @pl.when(k == pl.num_programs(1) - 1)
    def _():
        y = _ln_affine(acc_ref[...], p_ref[...].astype(jnp.float32),
                       eps=eps, do_ln=do_ln, c_valid=c_valid)
        o_ref[...] = y.astype(o_ref.dtype)


def feature_resizer(x, w, b, gamma, beta, *, eps=1e-12, do_ln=True,
                    mxu_dtype=None, tm_cap=1024,
                    force_ksplit=False, force_tk=None):
    """x: (B, L, C1) -> (B, L, C2).  w: (C1, C2), b/gamma/beta: (C2,)."""
    B, L, C1 = x.shape
    assert w.shape[0] == C1
    C2 = w.shape[1]
    N = B * L
    out_dtype = x.dtype

    # MXU operand dtype: bf16 for f32 inputs (halves x/W HBM + VMEM traffic,
    # native MXU dtype); LayerNorm renormalizes in f32 afterwards.
    if mxu_dtype is None:
        mxu_dtype = jnp.bfloat16 if x.dtype == jnp.float32 else x.dtype
    mxu_dtype = jnp.dtype(mxu_dtype)
    x_item = mxu_dtype.itemsize
    out_item = jnp.dtype(out_dtype).itemsize

    # Lane alignment only when needed (768/1024 -> 256 style shapes skip it).
    c1p = _round_up(C1, 128)
    c2p = _round_up(C2, 128)

    # ---- VMEM budgeting -----------------------------------------------------
    vmem_limit = _vmem_limit_bytes()
    budget = (vmem_limit * 3) // 4  # headroom for compiler-internal scratch

    # Grid-invariant weight + params are still double-buffered by the pipeline:
    # budget them honestly as 2 copies.
    resident_fixed = 2 * c1p * c2p * x_item + 2 * 3 * c2p * 4
    use_ksplit = force_ksplit or (resident_fixed > budget // 2)

    if use_ksplit:
        k_blocks = c1p // 128
        if force_tk is not None:
            assert force_tk % 128 == 0 and c1p % force_tk == 0
            tk = force_tk
        else:
            max_tk_blocks = max(1, (budget // 4) // (2 * 128 * c2p * x_item))
            tk_blocks = 1
            for d in range(min(k_blocks, max_tk_blocks), 0, -1):
                if k_blocks % d == 0:
                    tk_blocks = d
                    break
            tk = 128 * tk_blocks
        fixed = 2 * tk * c2p * x_item + 2 * 3 * c2p * 4
        # dbl-buffered x/out tiles + ~3 live f32 temps + f32 accumulator
        per_row = 2 * tk * x_item + 2 * c2p * out_item + 4 * c2p * 4
    else:
        tk = c1p
        fixed = resident_fixed
        # dbl-buffered x/out tiles + ~3 live (tm, C2p) f32 temps
        per_row = 2 * c1p * x_item + 2 * c2p * out_item + 3 * c2p * 4

    row_align = 8 if x_item >= 4 else (16 if x_item == 2 else 32)
    tm_budget = max(row_align, (budget - fixed) // max(per_row, 1))
    tm_budget = min(tm_budget, tm_cap)
    tm_budget = max(row_align, (tm_budget // row_align) * row_align)

    # Balance the row tile: padding waste < ntiles * row_align rows, and >= 2
    # grid steps whenever there is more than one sublane group of rows.
    ntiles = _cdiv(N, tm_budget)
    if N > row_align:
        ntiles = max(ntiles, 2)
    tm = _round_up(_cdiv(N, ntiles), row_align)
    n_pad = ntiles * tm

    # ---- operand slabs: cast + (only-if-needed) zero padding -----------------
    x2 = x.reshape(N, C1)
    if x2.dtype != mxu_dtype:
        x2 = x2.astype(mxu_dtype)
    if n_pad != N or c1p != C1:
        x2 = jnp.pad(x2, ((0, n_pad - N), (0, c1p - C1)))

    wp = w if w.dtype == mxu_dtype else w.astype(mxu_dtype)
    if c1p != C1 or c2p != C2:
        wp = jnp.pad(wp, ((0, c1p - C1), (0, c2p - C2)))

    params = jnp.stack([b.astype(jnp.float32),
                        gamma.astype(jnp.float32),
                        beta.astype(jnp.float32)])
    if c2p != C2:
        params = jnp.pad(params, ((0, 0), (0, c2p - C2)))

    # ---- pallas_call ----------------------------------------------------------
    if use_ksplit:
        kernel = functools.partial(_ksplit_kernel, eps=eps, do_ln=do_ln, c_valid=C2)
        call = pl.pallas_call(
            kernel,
            out_shape=jax.ShapeDtypeStruct((n_pad, c2p), out_dtype),
            grid_spec=pltpu.PrefetchScalarGridSpec(
                num_scalar_prefetch=0,
                grid=(n_pad // tm, c1p // tk),
                in_specs=[
                    pl.BlockSpec((tm, tk), lambda i, k: (i, k)),      # x tile
                    pl.BlockSpec((tk, c2p), lambda i, k: (k, 0)),     # W K-slice
                    pl.BlockSpec((3, c2p), lambda i, k: (0, 0)),      # bias/gamma/beta
                ],
                out_specs=pl.BlockSpec((tm, c2p), lambda i, k: (i, 0)),
                scratch_shapes=[pltpu.VMEM((tm, c2p), jnp.float32)],
            ),
            compiler_params=pltpu.CompilerParams(
                dimension_semantics=("parallel", "arbitrary"),
                vmem_limit_bytes=vmem_limit,
            ),
        )
    else:
        kernel = functools.partial(_resident_kernel, eps=eps, do_ln=do_ln, c_valid=C2)
        call = pl.pallas_call(
            kernel,
            out_shape=jax.ShapeDtypeStruct((n_pad, c2p), out_dtype),
            grid_spec=pltpu.PrefetchScalarGridSpec(
                num_scalar_prefetch=0,
                grid=(n_pad // tm,),
                in_specs=[
                    pl.BlockSpec((tm, c1p), lambda i: (i, 0)),        # x tile
                    pl.BlockSpec((c1p, c2p), lambda i: (0, 0)),       # resident weight
                    pl.BlockSpec((3, c2p), lambda i: (0, 0)),         # bias/gamma/beta
                ],
                out_specs=pl.BlockSpec((tm, c2p), lambda i: (i, 0)),
            ),
            compiler_params=pltpu.CompilerParams(
                dimension_semantics=("parallel",),
                vmem_limit_bytes=vmem_limit,
            ),
        )

    out2 = call(x2, wp, params)

    # Un-pad (these slices are no-ops when everything was already aligned).
    if n_pad != N:
        out2 = out2[:N]
    if c2p != C2:
        out2 = out2[:, :C2]
    return out2.reshape(B, L, C2)


if __name__ == "__main__":
    key = jax.random.PRNGKey(0)

    def make_inputs(key, B, L, C1, C2):
        kx, kw, kb = jax.random.split(key, 3)
        # nn.Linear default init U(-1/sqrt(C1), 1/sqrt(C1)); LN gamma=1, beta=0.
        bound = 1.0 / math.sqrt(C1)
        w = jax.random.uniform(kw, (C1, C2), jnp.float32, -bound, bound)
        b = jax.random.uniform(kb, (C2,), jnp.float32, -bound, bound)
        gamma = jnp.ones((C2,), jnp.float32)
        beta = jnp.zeros((C2,), jnp.float32)
        x = jax.random.normal(kx, (B, L, C1), jnp.float32)
        return x, w, b, gamma, beta

    def reference(x, w, b, gamma, beta, *, eps=1e-12, matmul_dtype=jnp.float32):
        y = jnp.dot(x.astype(matmul_dtype), w.astype(matmul_dtype),
                    preferred_element_type=jnp.float32,
                    precision=lax.Precision.HIGHEST) + b
        mean = y.mean(axis=-1, keepdims=True)
        var = ((y - mean) ** 2).mean(axis=-1, keepdims=True)
        return (y - mean) / jnp.sqrt(var + eps) * gamma + beta

    # --- Test 1: module-sized shapes, lane-padded C1/C2, default bf16 MXU path.
    x, w, b, gamma, beta = make_inputs(key, 2, 8, 32, 64)
    out = jax.block_until_ready(feature_resizer(x, w, b, gamma, beta))
    assert out.shape == (2, 8, 64) and out.dtype == x.dtype
    ref_bf = reference(x, w, b, gamma, beta, matmul_dtype=jnp.bfloat16)
    ref_f32 = reference(x, w, b, gamma, beta)
    assert bool(jnp.allclose(out, ref_bf, atol=5e-3, rtol=5e-3)), \
        float(jnp.abs(out - ref_bf).max())
    assert bool(jnp.allclose(out, ref_f32, atol=5e-2, rtol=5e-2)), \
        float(jnp.abs(out - ref_f32).max())

    # --- Test 2: lane-aligned shapes (no padding), exact f32 MXU operands,
    #             force the K-split accumulator path (2 K steps).
    x2_, w2_, b2_, g2_, be2_ = make_inputs(jax.random.PRNGKey(1), 2, 8, 256, 256)
    out2 = jax.block_until_ready(
        feature_resizer(x2_, w2_, b2_, g2_, be2_,
                        mxu_dtype=jnp.float32, force_ksplit=True, force_tk=128))
    assert out2.shape == (2, 8, 256) and out2.dtype == x2_.dtype
    ref2 = reference(x2_, w2_, b2_, g2_, be2_)
    assert bool(jnp.allclose(out2, ref2, atol=1e-4, rtol=1e-4)), \
        float(jnp.abs(out2 - ref2).max())

    print("KERNEL_OK")
</pallas_src>

<mosaic_0001>
module attributes {stable_mosaic.version = 11 : i64} {
  func.func @_resident_kernel(%arg0: i32, %arg1: memref<16x128xbf16, #tpu.memory_space<vmem>>, %arg2: memref<128x128xbf16, #tpu.memory_space<vmem>>, %arg3: memref<3x128xf32, #tpu.memory_space<vmem>>, %arg4: memref<16x128xf32, #tpu.memory_space<vmem>>) attributes {dimension_semantics = [#tpu.dimension_semantics<parallel>], iteration_bounds = array<i64: 1>, scalar_prefetch = 0 : i64, scratch_operands = 0 : i64, tpu.core_type = #tpu.core_type<tc>, window_params = [{transform_indices = @transform_0, window_bounds = array<i64: 16, 128>}, {pipeline_mode = #tpu.pipeline_mode<synchronous>, transform_indices = @transform_1, window_bounds = array<i64: 128, 128>}, {pipeline_mode = #tpu.pipeline_mode<synchronous>, transform_indices = @transform_2, window_bounds = array<i64: 3, 128>}, {transform_indices = @transform_3, window_bounds = array<i64: 16, 128>}]} {
    %c0 = arith.constant 0 : index
    %c0_0 = arith.constant 0 : index
    %0 = vector.load %arg1[%c0, %c0_0] : memref<16x128xbf16, #tpu.memory_space<vmem>>, vector<16x128xbf16>
    %c0_1 = arith.constant 0 : index
    %c0_2 = arith.constant 0 : index
    %1 = vector.load %arg2[%c0_1, %c0_2] : memref<128x128xbf16, #tpu.memory_space<vmem>>, vector<128x128xbf16>
    %cst = arith.constant dense<0.000000e+00> : vector<16x128xf32>
    %2 = tpu.matmul %0, %1, %cst {dimension_numbers = #tpu.dot_dimension_numbers<[1], [0], [0], [1], [0, 0, 1, 1], [], []>} : vector<16x128xbf16>, vector<128x128xbf16>, vector<16x128xf32> -> vector<16x128xf32>
    %c0_3 = arith.constant 0 : index
    %c0_4 = arith.constant 0 : index
    %3 = vector.load %arg3[%c0_3, %c0_4] : memref<3x128xf32, #tpu.memory_space<vmem>>, vector<3x128xf32>
    %4 = vector.extract_strided_slice %3 {offsets = [0, 0], sizes = [1, 128], strides = [1, 1]} : vector<3x128xf32> to vector<1x128xf32>
    %5 = vector.broadcast %4 : vector<1x128xf32> to vector<16x128xf32>
    %6 = arith.addf %2, %5 : vector<16x128xf32>
    %cst_5 = arith.constant dense<0.000000e+00> : vector<16xf32>
    %7 = vector.multi_reduction <add>, %6, %cst_5 [1] : vector<16x128xf32> to vector<16xf32>
    %8 = vector.shape_cast %7 : vector<16xf32> to vector<16x1xf32>
    %9 = arith.mulf %6, %6 : vector<16x128xf32>
    %cst_6 = arith.constant dense<0.000000e+00> : vector<16xf32>
    %10 = vector.multi_reduction <add>, %9, %cst_6 [1] : vector<16x128xf32> to vector<16xf32>
    %11 = vector.shape_cast %10 : vector<16xf32> to vector<16x1xf32>
    %cst_7 = arith.constant 1.562500e-02 : f32
    %12 = vector.broadcast %cst_7 : f32 to vector<16x1xf32>
    %13 = arith.mulf %8, %12 : vector<16x1xf32>
    %cst_8 = arith.constant 1.562500e-02 : f32
    %14 = vector.broadcast %cst_8 : f32 to vector<16x1xf32>
    %15 = arith.mulf %11, %14 : vector<16x1xf32>
    %16 = arith.mulf %13, %13 : vector<16x1xf32>
    %17 = arith.subf %15, %16 : vector<16x1xf32>
    %cst_9 = arith.constant 0.000000e+00 : f32
    %18 = vector.broadcast %cst_9 : f32 to vector<16x1xf32>
    %19 = arith.maximumf %17, %18 : vector<16x1xf32>
    %20 = vector.broadcast %13 : vector<16x1xf32> to vector<16x128xf32>
    %21 = arith.subf %6, %20 : vector<16x128xf32>
    %cst_10 = arith.constant 9.99999996E-13 : f32
    %22 = vector.broadcast %cst_10 : f32 to vector<16x1xf32>
    %23 = arith.addf %19, %22 : vector<16x1xf32>
    %24 = math.rsqrt %23 : vector<16x1xf32>
    %25 = vector.broadcast %24 : vector<16x1xf32> to vector<16x128xf32>
    %26 = arith.mulf %21, %25 : vector<16x128xf32>
    %27 = vector.extract_strided_slice %3 {offsets = [1, 0], sizes = [1, 128], strides = [1, 1]} : vector<3x128xf32> to vector<1x128xf32>
    %28 = vector.broadcast %27 : vector<1x128xf32> to vector<16x128xf32>
    %29 = arith.mulf %26, %28 : vector<16x128xf32>
    %30 = vector.extract_strided_slice %3 {offsets = [2, 0], sizes = [1, 128], strides = [1, 1]} : vector<3x128xf32> to vector<1x128xf32>
    %31 = vector.broadcast %30 : vector<1x128xf32> to vector<16x128xf32>
    %32 = arith.addf %29, %31 : vector<16x128xf32>
    %c0_11 = arith.constant 0 : index
    %c0_12 = arith.constant 0 : index
    %33 = vector.load %arg4[%c0_11, %c0_12] : memref<16x128xf32, #tpu.memory_space<vmem>>, vector<16x128xf32>
    tpu.vector_store %arg4[%c0_11, %c0_12], %32 {strides = array<i32>} : memref<16x128xf32, #tpu.memory_space<vmem>>, vector<16x128xf32>,
    return
  }
  func.func @transform_0(%arg0: i32) -> (i32, i32) {
    %c0_i32 = arith.constant 0 : i32
    %c0_i32_0 = arith.constant 0 : i32
    return %arg0, %c0_i32 : i32, i32
  }
  func.func @transform_1(%arg0: i32) -> (i32, i32) {
    %c0_i32 = arith.constant 0 : i32
    %c0_i32_0 = arith.constant 0 : i32
    %c0_i32_1 = arith.constant 0 : i32
    return %c0_i32, %c0_i32_0 : i32, i32
  }
  func.func @transform_2(%arg0: i32) -> (i32, i32) {
    %c0_i32 = arith.constant 0 : i32
    %c0_i32_0 = arith.constant 0 : i32
    %c0_i32_1 = arith.constant 0 : i32
    return %c0_i32, %c0_i32_0 : i32, i32
  }
  func.func @transform_3(%arg0: i32) -> (i32, i32) {
    %c0_i32 = arith.constant 0 : i32
    %c0_i32_0 = arith.constant 0 : i32
    return %arg0, %c0_i32 : i32, i32
  }
}

</mosaic_0001>

<llo_original>
// kernel: tpu_custom_call.1
$region0: #{tpu_custom_call.1}
  #allocation0 [shape = 'u32[]', space=smem, size = 0x4, offset = 0x4, fixed_abs, tag = 'smem constant byte address 0x4 - core index']
  #allocation1 [shape = 'u32[72,128]{1,0:T(1,128)}', space=vmem, size = 0x9000, scoped, tag = 'internal scratch']
  %s0 = inlined_call_operand.hbm [shape: bf16[16,128], index: 0, kind: input, shape index: {}]
  %s1 = inlined_call_operand.hbm [shape: bf16[128,128], index: 1, kind: input, shape index: {}]
  %s2 = inlined_call_operand.hbm [shape: f32[3,128], index: 2, kind: input, shape index: {}]
  %s3 = inlined_call_operand.hbm [shape: f32[16,128], index: 3, kind: output, shape index: {}]
  %s4 = sld [smem:[#allocation0]]
  $region34: #{tpu_custom_call.1} parent=0
    _
  %s6 = ssub.s32 1, %s4
  %s7 = scalar_select 0, %s6, %s4
  $region1: #{tpu_custom_call.1} parent=0
    #allocation2 [shape = 'u8[4096]{0}', space=vmem, size = 0x1000, scoped, tag = 'input window, operand 0, single buffered']
    #allocation3 [shape = 's32[1]{0}', space=sflag, size = 0x4, scoped, tag = 'scoped memory for tpu_custom_call.1']
    #allocation4 [shape = 's32[1]{0}', space=sflag, size = 0x4, scoped, tag = 'scoped memory for tpu_custom_call.1']
    #allocation5 [shape = 'u8[32768]{0}', space=vmem, size = 0x8000, scoped, tag = 'input window, operand 1, single buffered']
    #allocation6 [shape = 's32[1]{0}', space=sflag, size = 0x4, scoped, tag = 'scoped memory for tpu_custom_call.1']
    #allocation7 [shape = 'u8[2048]{0}', space=vmem, size = 0x800, scoped, tag = 'input window, operand 2, single buffered']
    #allocation8 [shape = 'u8[8192]{0}', space=vmem, size = 0x2000, scoped, tag = 'output window, operand 0, single buffered']
    %8 = vsyncpa [#allocation3], 0
    %9 = vsyncpa [#allocation6], 0
    %10 = vsyncpa [#allocation4], 0
    // Predicated region
    $region2: #{tpu_custom_call.1} parent=1 // pred_check
      _
    $region3: #{tpu_custom_call.1} parent=1 // pred_check_branch
      %12 = sbr.rel (0) target = $region5
    $region4: #{tpu_custom_call.1} parent=1 // pred_region
      %14 = vsyncadd [#allocation3], 0
      %s15 = sshll.u32 %s0, 4
      %s16 = int_to_ptr.hbm [resolvable:$true] %s15
      %s17 = sshll.u32 [#allocation2], 4
      %s18 = int_to_ptr.vmem [resolvable:$true] %s17
      %23 = dma.hbm_to_vmem [thread:$0]  %s16, 128, %s18, [#allocation3], 64, 64, 4
    $region5: #{tpu_custom_call.1} parent=1 // pred_fallthru
      _
    // Predicated region
    $region6: #{tpu_custom_call.1} parent=1 // pred_check
      _
    $region7: #{tpu_custom_call.1} parent=1 // pred_check_branch
      %25 = sbr.rel (0) target = $region9
    $region8: #{tpu_custom_call.1} parent=1 // pred_region
      %27 = vsyncadd [#allocation6], 0
      %s28 = sshll.u32 %s1, 4
      %s29 = int_to_ptr.hbm [resolvable:$true] %s28
      %s30 = sshll.u32 [#allocation5], 4
      %s31 = int_to_ptr.vmem [resolvable:$true] %s30
      %36 = dma.hbm_to_vmem [thread:$0]  %s29, 1024, %s31, [#allocation6], 64, 64, 4
    $region9: #{tpu_custom_call.1} parent=1 // pred_fallthru
      _
    // Predicated region
    $region10: #{tpu_custom_call.1} parent=1 // pred_check
      _
    $region11: #{tpu_custom_call.1} parent=1 // pred_check_branch
      %38 = sbr.rel (0) target = $region13
    $region12: #{tpu_custom_call.1} parent=1 // pred_region
      %40 = vsyncadd [#allocation6], 0
      %s42 = sshll.u32 %s2, 4
      %s43 = int_to_ptr.hbm [resolvable:$true] %s42
      %s44 = sshll.u32 [#allocation7], 4
      %s45 = int_to_ptr.vmem [resolvable:$true] %s44
      %47 = dma.hbm_to_vmem [thread:$0]  %s43, 64, %s45, [#allocation6]
    $region13: #{tpu_custom_call.1} parent=1 // pred_fallthru
      _
    // Predicated region
    $region14: #{tpu_custom_call.1} parent=1 // pred_check
      _
    $region15: #{tpu_custom_call.1} parent=1 // pred_check_branch
      %49 = sbr.rel (0) target = $region17
    $region16: #{tpu_custom_call.1} parent=1 // pred_region
      %51 = dma.done [#allocation3], 128
    $region17: #{tpu_custom_call.1} parent=1 // pred_fallthru
      _
    // Predicated region
    $region18: #{tpu_custom_call.1} parent=1 // pred_check
      _
    $region19: #{tpu_custom_call.1} parent=1 // pred_check_branch
      %53 = sbr.rel (0) target = $region21
    $region20: #{tpu_custom_call.1} parent=1 // pred_region
      %55 = dma.done [#allocation6], 1024
    $region21: #{tpu_custom_call.1} parent=1 // pred_fallthru
      _
    // Predicated region
    $region22: #{tpu_custom_call.1} parent=1 // pred_check
      _
    $region23: #{tpu_custom_call.1} parent=1 // pred_check_branch
      %57 = sbr.rel (0) target = $region25
    $region24: #{tpu_custom_call.1} parent=1 // pred_region
      %59 = dma.done [#allocation6], 64
    $region25: #{tpu_custom_call.1} parent=1 // pred_fallthru
      _
    %v60 = vld [vmem:[#allocation2] sm:$0xf]
    %v61 = vld [vmem:[#allocation2 + $0x4] sm:$0xf]
    %v62 = vld [vmem:[#allocation5] sm:$0xf]
    %v63 = vld [vmem:[#allocation5 + $0x4] sm:$0xf]
    %v64 = vld [vmem:[#allocation5 + $0x8] sm:$0xf]
    %v65 = vld [vmem:[#allocation5 + $0xc] sm:$0xf]
    %v66 = vld [vmem:[#allocation5 + $0x10] sm:$0xf]
    %v67 = vld [vmem:[#allocation5 + $0x14] sm:$0xf]
    %v68 = vld [vmem:[#allocation5 + $0x18] sm:$0xf]
    %v69 = vld [vmem:[#allocation5 + $0x1c] sm:$0xf]
    %v70 = vld [vmem:[#allocation5 + $0x20] sm:$0xf]
    %v71 = vld [vmem:[#allocation5 + $0x24] sm:$0xf]
    %v72 = vld [vmem:[#allocation5 + $0x28] sm:$0xf]
    %v73 = vld [vmem:[#allocation5 + $0x2c] sm:$0xf]
    %v74 = vld [vmem:[#allocation5 + $0x30] sm:$0xf]
    %v75 = vld [vmem:[#allocation5 + $0x34] sm:$0xf]
    %v76 = vld [vmem:[#allocation5 + $0x38] sm:$0xf]
    %v77 = vld [vmem:[#allocation5 + $0x3c] sm:$0xf]
    %v78 = vld [vmem:[#allocation7] sm:$0x7]
    %v79 = vperm.slane %v78, 0
    %v82 = vunpack.c.l.b16 %v60
    %v83 = vunpack.c.l.b16 %v61
    %v84 = vpack.c.b16 %v83, %v82
    %v102 = vunpack.c.l.b16 %v62
    %v103 = vunpack.c.l.b16 %v63
    %v104 = vunpack.c.l.b16 %v64
    %v105 = vunpack.c.l.b16 %v65
    %v106 = vunpack.c.l.b16 %v66
    %v107 = vunpack.c.l.b16 %v67
    %v108 = vunpack.c.l.b16 %v68
    %v109 = vunpack.c.l.b16 %v69
    %v110 = vunpack.c.l.b16 %v70
    %v111 = vunpack.c.l.b16 %v71
    %v112 = vunpack.c.l.b16 %v72
    %v113 = vunpack.c.l.b16 %v73
    %v114 = vunpack.c.l.b16 %v74
    %v115 = vunpack.c.l.b16 %v75
    %v116 = vunpack.c.l.b16 %v76
    %v117 = vunpack.c.l.b16 %v77
    %v118 = vpack.c.b16 %v103, %v102
    %v119 = vpack.c.b16 %v105, %v104
    %v120 = vpack.c.b16 %v107, %v106
    %v121 = vpack.c.b16 %v109, %v108
    %v122 = vpack.c.b16 %v111, %v110
    %v123 = vpack.c.b16 %v113, %v112
    %v124 = vpack.c.b16 %v115, %v114
    %v125 = vpack.c.b16 %v117, %v116
    %134 = vmatpush.bf16.msra.mxu0 %v125
    %135 = vmatpush.bf16.msra.mxu0 %v124
    %136 = vmatpush.bf16.msra.mxu0 %v123
    %137 = vmatpush.bf16.msra.mxu0 %v122
    %138 = vmatpush.bf16.msra.mxu0 %v121
    %139 = vmatpush.bf16.msra.mxu0 %v120
    %140 = vmatpush.bf16.msra.mxu0 %v119
    %141 = vmatpush.bf16.msra.mxu0 %v118
    %142 = vmatmul.bf16.gmra.mxu0 %v84
    %v143 = vpop.f32.mrf.mxu0
    %v144 = vadd.f32 %v79, %v143
    %v145 = vpop.f32.mrf.mxu0
    %v146 = vadd.f32 %v79, %v145
    %147 = vdwg.mxu0
    %148 = vadd.xlane.f32.xlu0 %v144
    %v149 = vpop.xlane.xlu0 %148
    %150 = vadd.xlane.f32.xlu0 %v146
    %v151 = vpop.xlane.xlu0 %150
    %v152 = vmul.f32 %v144, %v144
    %v153 = vmul.f32 %v146, %v146
    %154 = vadd.xlane.f32.xlu0 %v152
    %v155 = vpop.xlane.xlu0 %154
    %156 = vadd.xlane.f32.xlu0 %v153
    %v157 = vpop.xlane.xlu0 %156
    %v158 = vmul.f32 %v149, 0.015625
    %v159 = vmul.f32 %v151, 0.015625
    %v160 = vmul.f32 %v155, 0.015625
    %v161 = vmul.f32 %v157, 0.015625
    %v162 = vmul.f32 %v158, %v158
    %v163 = vmul.f32 %v159, %v159
    %v164 = vsub.f32 %v160, %v162
    %v165 = vsub.f32 %v161, %v163
    %v166 = vmax.f32 %v164, 0.0
    %v167 = vmax.f32 %v165, 0.0
    %v168 = vsub.f32 %v144, %v158
    %v169 = vsub.f32 %v146, %v159
    %v170 = vadd.f32 %v166, 1e-12
    %v171 = vadd.f32 %v167, 1e-12
    %v172 = vrsqrt.pop %v170
    %v173 = vmul.f32 %v172, %v170
    %v174 = vmul.f32 %v173, %v172
    %v175 = vmul.f32 0.5, %v174
    %v176 = vsub.f32 1.5, %v175
    %v177 = vmul.f32 %v172, %v176
    %vm178 = vweird.f32 %v170
    %vm179 = vweird.f32 %v172
    %vm180 = vmor %vm178, %vm179
    %v181 = vsel %vm180, %v172, %v177
    %v182 = vrsqrt.pop %v171
    %v183 = vmul.f32 %v182, %v171
    %v184 = vmul.f32 %v183, %v182
    %v185 = vmul.f32 0.5, %v184
    %v186 = vsub.f32 1.5, %v185
    %v187 = vmul.f32 %v182, %v186
    %vm188 = vweird.f32 %v171
    %vm189 = vweird.f32 %v182
    %vm190 = vmor %vm188, %vm189
    %v191 = vsel %vm190, %v182, %v187
    %v192 = vmul.f32 %v168, %v181
    %v193 = vmul.f32 %v169, %v191
    %v194 = vperm.slane %v78, 1
    %v195 = vmul.f32 %v192, %v194
    %v196 = vmul.f32 %v193, %v194
    %v197 = vperm.slane %v78, 2
    %v198 = vadd.f32 %v195, %v197
    %v199 = vadd.f32 %v196, %v197
    %200 = vst [vmem:[#allocation8] sm:$0xff] %v198
    %201 = vst [vmem:[#allocation8 + $0x8] sm:$0xff] %v199
    // Predicated region
    $region26: #{tpu_custom_call.1} parent=1 // pred_check
      _
    $region27: #{tpu_custom_call.1} parent=1 // pred_check_branch
      %203 = sbr.rel (0) target = $region29
    $region28: #{tpu_custom_call.1} parent=1 // pred_region
      %205 = vsyncadd [#allocation4], 0
      %s206 = sshll.u32 [#allocation8], 4
      %s207 = int_to_ptr.vmem [resolvable:$true] %s206
      %s208 = sshll.u32 %s3, 4
      %s209 = int_to_ptr.hbm [resolvable:$true] %s208
      %214 = dma.vmem_to_hbm [thread:$0]  %s207, 256, %s209, [#allocation4], 128, 128, 8
    $region29: #{tpu_custom_call.1} parent=1 // pred_fallthru
      _
    // Predicated region
    $region30: #{tpu_custom_call.1} parent=1 // pred_check
      _
    $region31: #{tpu_custom_call.1} parent=1 // pred_check_branch
      %216 = sbr.rel (0) target = $region33
    $region32: #{tpu_custom_call.1} parent=1 // pred_region
      %218 = dma.done [#allocation4], 256
    $region33: #{tpu_custom_call.1} parent=1 // pred_fallthru
      _
    %219 = vsyncpa [#allocation3], 1
    %220 = vsyncpa [#allocation6], 1
    %221 = vsyncpa [#allocation4], 1

</llo_original>
